<compile_context>
chip_gen: v7x
topology: tpu7x:2x2x1
jax: 0.10.0
libtpu: 0.0.40
codegen_flags: <defaults>
</compile_context>

<pallas_src>
import functools
import math

import jax
import jax.numpy as jnp
from jax.experimental import pallas as pl
from jax.experimental.pallas import tpu as pltpu


def _round_up(x, m):
    return ((x + m - 1) // m) * m


def _lmcl_kernel(emb_ref, centers_t_ref, inv_cnorm_ref, label_ref, out_ref, *,
                 scale, margin, use_bf16):
    tb, tc = out_ref.shape

    # --- F.normalize(emb) (eps=1e-12): x * rsqrt(max(||x||^2, 1e-24)) ---
    emb = emb_ref[...].astype(jnp.float32)                          # (tb, D)
    sq = jnp.sum(emb * emb, axis=1, keepdims=True)                  # (tb, 1)
    emb_n = emb * jax.lax.rsqrt(jnp.maximum(sq, 1e-24))

    # --- cosine = emb_n @ centers.T with centers pre-transposed (D, tc);
    #     per-class inverse norms applied as a broadcast column scale ---
    centers_t = centers_t_ref[...]
    if use_bf16:
        lhs = emb_n.astype(jnp.bfloat16)
        rhs = centers_t.astype(jnp.bfloat16)
    else:
        lhs = emb_n
        rhs = centers_t.astype(jnp.float32)
    cos = jax.lax.dot_general(lhs, rhs, (((1,), (0,)), ((), ())),
                              preferred_element_type=jnp.float32)   # (tb, tc)
    cos = cos * inv_cnorm_ref[...]                                  # (1, tc) bcast
    cos = jnp.clip(cos, -1.0, 1.0)

    # --- one_hot.scatter_ equivalent: iota offset by the class-block origin ---
    class_ids = (jax.lax.broadcasted_iota(jnp.int32, (tb, tc), 1)
                 + pl.program_id(1) * tc)
    is_target = class_ids == label_ref[...]                         # (tb, 1) bcast

    # output = scale * (cosine - margin * one_hot)
    out = scale * jnp.where(is_target, cos - margin, cos)
    out_ref[...] = out.astype(out_ref.dtype)


def large_margin_cosine_forward(emb, label, class_centers, *, scale, margin,
                                tb=256, tc=1024, use_bf16_matmul=False):
    """CosFace/LMCL forward. emb (B, D), label (B,), class_centers (C, D)."""
    B, D = emb.shape
    C, D2 = class_centers.shape
    assert D == D2

    # One-off prep (per review): pre-transposed centers + precomputed inverse
    # row norms so the kernel never transposes or re-normalizes the centers.
    centers_f32 = class_centers.astype(jnp.float32)
    centers_t = centers_f32.T                                          # (D, C)
    cen_sq = jnp.sum(centers_f32 * centers_f32, axis=1)
    inv_cnorm = jax.lax.rsqrt(jnp.maximum(cen_sq, 1e-24)).reshape(1, C)  # (1, C)

    # Tile sizes: multiples of (8, 128) so blocks are layout-legal and output
    # stores are lane-dense; pad B/C up to tile multiples.
    tb = min(tb, _round_up(B, 8))
    tc = min(tc, _round_up(C, 128))
    Bp = _round_up(B, tb)
    Cp = _round_up(C, tc)

    emb_p = jnp.pad(emb.astype(jnp.float32), ((0, Bp - B), (0, 0)))
    centers_t_p = jnp.pad(centers_t, ((0, 0), (0, Cp - C)))
    inv_cnorm_p = jnp.pad(inv_cnorm, ((0, 0), (0, Cp - C)))
    label_p = jnp.pad(label.astype(jnp.int32).reshape(-1, 1),
                      ((0, Bp - B), (0, 0)), constant_values=-1)

    grid = (Bp // tb, Cp // tc)
    kernel = functools.partial(_lmcl_kernel, scale=float(scale),
                               margin=float(margin), use_bf16=use_bf16_matmul)

    out_p = pl.pallas_call(
        kernel,
        out_shape=jax.ShapeDtypeStruct((Bp, Cp), jnp.float32),
        grid_spec=pltpu.PrefetchScalarGridSpec(
            num_scalar_prefetch=0,
            grid=grid,
            in_specs=[
                pl.BlockSpec((tb, D), lambda i, j: (i, 0)),   # emb        (Bp, D)
                pl.BlockSpec((D, tc), lambda i, j: (0, j)),   # centers.T  (D, Cp)
                pl.BlockSpec((1, tc), lambda i, j: (0, j)),   # 1/||c||    (1, Cp)
                pl.BlockSpec((tb, 1), lambda i, j: (i, 0)),   # labels     (Bp, 1)
            ],
            out_specs=pl.BlockSpec((tb, tc), lambda i, j: (i, j)),
        ),
        compiler_params=pltpu.CompilerParams(
            dimension_semantics=("parallel", "parallel")),
        cost_estimate=pl.CostEstimate(
            flops=2 * Bp * Cp * D,
            transcendentals=0,
            bytes_accessed=4 * (Bp * D + D * Cp + Cp + Bp + Bp * Cp)),
    )(emb_p, centers_t_p, inv_cnorm_p, label_p)

    return out_p[:B, :C]


def _reference(emb, label, class_centers, *, scale, margin):
    """Pure-JAX reference mirroring the PyTorch forward exactly."""
    C = class_centers.shape[0]
    emb_n = emb / jnp.maximum(jnp.linalg.norm(emb, axis=1, keepdims=True), 1e-12)
    cc_n = class_centers / jnp.maximum(
        jnp.linalg.norm(class_centers, axis=1, keepdims=True), 1e-12)
    cos = jnp.clip(emb_n @ cc_n.T, -1.0, 1.0)
    one_hot = jax.nn.one_hot(label, C, dtype=jnp.float32)
    return scale * (cos - margin * one_hot)


if __name__ == "__main__":
    num_classes, emb_dim = 16, 32
    batch = 8
    scale, margin = 30.0, 0.2

    key = jax.random.PRNGKey(0)
    k_cc, k_emb, k_lab = jax.random.split(key, 3)

    # nn.init.xavier_uniform_ on a (num_classes, emb_dim) weight:
    bound = math.sqrt(6.0 / (num_classes + emb_dim))
    class_centers = jax.random.uniform(
        k_cc, (num_classes, emb_dim), jnp.float32, minval=-bound, maxval=bound)
    emb = jax.random.normal(k_emb, (batch, emb_dim), dtype=jnp.float32)
    label = jax.random.randint(k_lab, (batch,), 0, num_classes, dtype=jnp.int32)

    # f32-MXU path: tight parity with the PyTorch-equivalent reference.
    out = large_margin_cosine_forward(emb, label, class_centers,
                                      scale=scale, margin=margin)
    out = jax.block_until_ready(out)
    assert out.shape == (batch, num_classes)
    assert out.dtype == jnp.float32

    ref = _reference(emb, label, class_centers, scale=scale, margin=margin)
    assert jnp.allclose(out, ref, atol=2e-4, rtol=1e-5), (
        float(jnp.max(jnp.abs(out - ref))))

    # bf16-MXU fast path (f32 accumulate + f32 epilogue): looser tolerance.
    out_bf16 = large_margin_cosine_forward(emb, label, class_centers,
                                           scale=scale, margin=margin,
                                           use_bf16_matmul=True)
    out_bf16 = jax.block_until_ready(out_bf16)
    assert jnp.allclose(out_bf16, ref, atol=0.5), (
        float(jnp.max(jnp.abs(out_bf16 - ref))))

    print("KERNEL_OK")
</pallas_src>

<mosaic_0001>
module attributes {stable_mosaic.version = 11 : i64} {
  func.func @_lmcl_kernel(%arg0: i32, %arg1: i32, %arg2: memref<8x32xf32, #tpu.memory_space<vmem>>, %arg3: memref<32x128xf32, #tpu.memory_space<vmem>>, %arg4: memref<1x128xf32, #tpu.memory_space<vmem>>, %arg5: memref<8x1xi32, #tpu.memory_space<vmem>>, %arg6: memref<8x128xf32, #tpu.memory_space<vmem>>) attributes {dimension_semantics = [#tpu.dimension_semantics<parallel>, #tpu.dimension_semantics<parallel>], iteration_bounds = array<i64: 1, 1>, scalar_prefetch = 0 : i64, scratch_operands = 0 : i64, tpu.core_type = #tpu.core_type<tc>, window_params = [{transform_indices = @transform_0, window_bounds = array<i64: 8, 32>}, {transform_indices = @transform_1, window_bounds = array<i64: 32, 128>}, {transform_indices = @transform_2, window_bounds = array<i64: 1, 128>}, {transform_indices = @transform_3, window_bounds = array<i64: 8, 1>}, {transform_indices = @transform_4, window_bounds = array<i64: 8, 128>}]} {
    %c0 = arith.constant 0 : index
    %c0_0 = arith.constant 0 : index
    %0 = vector.load %arg2[%c0, %c0_0] : memref<8x32xf32, #tpu.memory_space<vmem>>, vector<8x32xf32>
    %1 = arith.mulf %0, %0 : vector<8x32xf32>
    %cst = arith.constant dense<0.000000e+00> : vector<8xf32>
    %2 = vector.multi_reduction <add>, %1, %cst [1] : vector<8x32xf32> to vector<8xf32>
    %3 = vector.shape_cast %2 : vector<8xf32> to vector<8x1xf32>
    %cst_1 = arith.constant 1.000000e-24 : f32
    %4 = vector.broadcast %cst_1 : f32 to vector<8x1xf32>
    %5 = arith.maximumf %3, %4 : vector<8x1xf32>
    %6 = math.rsqrt %5 : vector<8x1xf32>
    %7 = vector.broadcast %6 : vector<8x1xf32> to vector<8x32xf32>
    %8 = arith.mulf %0, %7 : vector<8x32xf32>
    %c0_2 = arith.constant 0 : index
    %c0_3 = arith.constant 0 : index
    %9 = vector.load %arg3[%c0_2, %c0_3] : memref<32x128xf32, #tpu.memory_space<vmem>>, vector<32x128xf32>
    %cst_4 = arith.constant dense<0.000000e+00> : vector<8x128xf32>
    %10 = tpu.matmul %8, %9, %cst_4 {dimension_numbers = #tpu.dot_dimension_numbers<[1], [0], [0], [1], [0, 0, 1, 1], [], []>} : vector<8x32xf32>, vector<32x128xf32>, vector<8x128xf32> -> vector<8x128xf32>
    %c0_5 = arith.constant 0 : index
    %c0_6 = arith.constant 0 : index
    %11 = vector.load %arg4[%c0_5, %c0_6] : memref<1x128xf32, #tpu.memory_space<vmem>>, vector<1x128xf32>
    %12 = vector.broadcast %11 : vector<1x128xf32> to vector<8x128xf32>
    %13 = arith.mulf %10, %12 : vector<8x128xf32>
    %cst_7 = arith.constant -1.000000e+00 : f32
    %cst_8 = arith.constant 1.000000e+00 : f32
    %14 = vector.broadcast %cst_7 : f32 to vector<8x128xf32>
    %15 = arith.maximumf %14, %13 : vector<8x128xf32>
    %16 = vector.broadcast %cst_8 : f32 to vector<8x128xf32>
    %17 = arith.minimumf %16, %15 : vector<8x128xf32>
    %18 = tpu.iota {dimensions = array<i32: 1>} : vector<8x128xi32>
    %c128_i32 = arith.constant 128 : i32
    %19 = arith.muli %arg1, %c128_i32 : i32
    %20 = vector.broadcast %19 : i32 to vector<8x128xi32>
    %21 = arith.addi %18, %20 : vector<8x128xi32>
    %c0_9 = arith.constant 0 : index
    %c0_10 = arith.constant 0 : index
    %22 = vector.load %arg5[%c0_9, %c0_10] : memref<8x1xi32, #tpu.memory_space<vmem>>, vector<8x1xi32>
    %23 = vector.broadcast %22 : vector<8x1xi32> to vector<8x128xi32>
    %24 = arith.cmpi eq, %21, %23 : vector<8x128xi32>
    %cst_11 = arith.constant 2.000000e-01 : f32
    %25 = vector.broadcast %cst_11 : f32 to vector<8x128xf32>
    %26 = arith.subf %17, %25 : vector<8x128xf32>
    %27 = arith.select %24, %26, %17 : vector<8x128xi1>, vector<8x128xf32>
    %cst_12 = arith.constant 3.000000e+01 : f32
    %28 = vector.broadcast %cst_12 : f32 to vector<8x128xf32>
    %29 = arith.mulf %28, %27 : vector<8x128xf32>
    %c0_13 = arith.constant 0 : index
    %c0_14 = arith.constant 0 : index
    %30 = vector.load %arg6[%c0_13, %c0_14] : memref<8x128xf32, #tpu.memory_space<vmem>>, vector<8x128xf32>
    tpu.vector_store %arg6[%c0_13, %c0_14], %29 {strides = array<i32>} : memref<8x128xf32, #tpu.memory_space<vmem>>, vector<8x128xf32>,
    return
  }
  func.func @transform_0(%arg0: i32, %arg1: i32) -> (i32, i32) {
    %c0_i32 = arith.constant 0 : i32
    %c0_i32_0 = arith.constant 0 : i32
    return %arg0, %c0_i32 : i32, i32
  }
  func.func @transform_1(%arg0: i32, %arg1: i32) -> (i32, i32) {
    %c0_i32 = arith.constant 0 : i32
    %c0_i32_0 = arith.constant 0 : i32
    return %c0_i32, %arg1 : i32, i32
  }
  func.func @transform_2(%arg0: i32, %arg1: i32) -> (i32, i32) {
    %c0_i32 = arith.constant 0 : i32
    %c0_i32_0 = arith.constant 0 : i32
    return %c0_i32, %arg1 : i32, i32
  }
  func.func @transform_3(%arg0: i32, %arg1: i32) -> (i32, i32) {
    %c0_i32 = arith.constant 0 : i32
    %c0_i32_0 = arith.constant 0 : i32
    return %arg0, %c0_i32 : i32, i32
  }
  func.func @transform_4(%arg0: i32, %arg1: i32) -> (i32, i32) {
    %c0_i32 = arith.constant 0 : i32
    return %arg0, %arg1 : i32, i32
  }
}

</mosaic_0001>

<llo_original>
// kernel: tpu_custom_call.1
$region0: #{tpu_custom_call.1}
  #allocation0 [shape = 'u32[]', space=smem, size = 0x4, offset = 0x4, fixed_abs, tag = 'smem constant byte address 0x4 - core index']
  #allocation1 [shape = 'u32[144,128]{1,0:T(1,128)}', space=vmem, size = 0x12000, scoped, tag = 'internal scratch']
  %s0 = inlined_call_operand.vmem [shape: f32[8,32], index: 0, kind: input, shape index: {}]
  %s1 = inlined_call_operand.hbm [shape: f32[32,128], index: 1, kind: input, shape index: {}]
  %s2 = inlined_call_operand.vmem [shape: f32[1,128], index: 2, kind: input, shape index: {}]
  %s3 = inlined_call_operand.vmem [shape: s32[8,1], index: 3, kind: input, shape index: {}]
  %s4 = inlined_call_operand.hbm [shape: f32[8,128], index: 4, kind: output, shape index: {}]
  %s5 = sld [smem:[#allocation0]]
  $region30: #{tpu_custom_call.1} parent=0
    _
  %s7 = ssub.s32 1, %s5
  %s8 = scalar_select 0, %s7, %s5
  $region1: #{tpu_custom_call.1} parent=0
    #allocation2 [shape = 'u8[16384]{0}', space=vmem, size = 0x4000, scoped, tag = 'input window, operand 1, single buffered']
    #allocation3 [shape = 's32[1]{0}', space=sflag, size = 0x4, scoped, tag = 'scoped memory for tpu_custom_call.1']
    #allocation4 [shape = 's32[1]{0}', space=sflag, size = 0x4, scoped, tag = 'scoped memory for tpu_custom_call.1']
    #allocation5 [shape = 'u8[4096]{0}', space=vmem, size = 0x1000, scoped, tag = 'output window, operand 0, single buffered']
    %9 = vsyncpa [#allocation3], 0
    %10 = vsyncpa [#allocation4], 0
    // Predicated region
    $region2: #{tpu_custom_call.1} parent=1 // pred_check
      _
    $region3: #{tpu_custom_call.1} parent=1 // pred_check_branch
      %12 = sbr.rel (0) target = $region5
    $region4: #{tpu_custom_call.1} parent=1 // pred_region
      _
    $region5: #{tpu_custom_call.1} parent=1 // pred_fallthru
      _
    // Predicated region
    $region6: #{tpu_custom_call.1} parent=1 // pred_check
      _
    $region7: #{tpu_custom_call.1} parent=1 // pred_check_branch
      %14 = sbr.rel (0) target = $region9
    $region8: #{tpu_custom_call.1} parent=1 // pred_region
      %s16 = ssub.s32 512, 512
      %17 = vsyncadd [#allocation3], %s16
      %s18 = sshll.u32 [#allocation2], 4
      %s19 = int_to_ptr.vmem [resolvable:$true] %s18
      %24 = dma.hbm_to_vmem [thread:$0]  %s1, 512, %s19, [#allocation3], 128, 128, 8
    $region9: #{tpu_custom_call.1} parent=1 // pred_fallthru
      _
    // Predicated region
    $region10: #{tpu_custom_call.1} parent=1 // pred_check
      _
    $region11: #{tpu_custom_call.1} parent=1 // pred_check_branch
      %26 = sbr.rel (0) target = $region13
    $region12: #{tpu_custom_call.1} parent=1 // pred_region
      _
    $region13: #{tpu_custom_call.1} parent=1 // pred_fallthru
      _
    // Predicated region
    $region14: #{tpu_custom_call.1} parent=1 // pred_check
      _
    $region15: #{tpu_custom_call.1} parent=1 // pred_check_branch
      %28 = sbr.rel (0) target = $region17
    $region16: #{tpu_custom_call.1} parent=1 // pred_region
      _
    $region17: #{tpu_custom_call.1} parent=1 // pred_fallthru
      _
    // Predicated region
    $region18: #{tpu_custom_call.1} parent=1 // pred_check
      _
    $region19: #{tpu_custom_call.1} parent=1 // pred_check_branch
      %30 = sbr.rel (0) target = $region21
    $region20: #{tpu_custom_call.1} parent=1 // pred_region
      %31 = dma.done [#allocation3], 512
    $region21: #{tpu_custom_call.1} parent=1 // pred_fallthru
      _
    %v32 = vld [vmem:[%s0] sm:$0xff]
    %v33 = vmul.f32 %v32, %v32
    %vm34 = vcmask 261120
    %v35 = vsel %vm34, %v33, 0.0
    %36 = vadd.xlane.f32.xlu0 %v35
    %v37 = vpop.xlane.xlu0 %36
    %v38 = vmax.f32 %v37, 1e-24
    %v39 = vrsqrt.pop %v38
    %v40 = vmul.f32 %v32, %v39
    %v41 = vld [vmem:[#allocation2] sm:$0xff]
    %v42 = vld [vmem:[#allocation2 + $0x8] sm:$0xff]
    %v43 = vld [vmem:[#allocation2 + $0x10] sm:$0xff]
    %v44 = vld [vmem:[#allocation2 + $0x18] sm:$0xff]
    %v46 = vsel %vm34, %v40, 0
    %48 = vmatprep.subr.mxu0 0.0
    %49 = vmatpush1.msra.mxu0 %v41
    %50 = vmatprep.subr.mxu0 0.0
    %51 = vmatpush1.msra.mxu0 %v42
    %52 = vmatprep.subr.mxu0 0.0
    %53 = vmatpush1.msra.mxu0 %v43
    %54 = vmatprep.subr.mxu0 0.0
    %55 = vmatpush1.msra.mxu0 %v44
    %56 = vmatprep.subr.mxu0 0.0
    %57 = vmatpush1.msra.mxu0 0.0
    %58 = vmatprep.subr.mxu0 0.0
    %59 = vmatpush1.msra.mxu0 0.0
    %60 = vmatprep.subr.mxu0 0.0
    %61 = vmatpush1.msra.mxu0 0.0
    %62 = vmatprep.subr.mxu0 0.0
    %63 = vmatpush1.msra.mxu0 0.0
    %64 = vmatprep.subr.mxu0 0.0
    %65 = vmatpush1.msra.mxu0 0.0
    %66 = vmatprep.subr.mxu0 0.0
    %67 = vmatpush1.msra.mxu0 0.0
    %68 = vmatprep.subr.mxu0 0.0
    %69 = vmatpush1.msra.mxu0 0.0
    %70 = vmatprep.subr.mxu0 0.0
    %71 = vmatpush1.msra.mxu0 0.0
    %72 = vmatprep.subr.mxu0 0.0
    %73 = vmatpush1.msra.mxu0 0.0
    %74 = vmatprep.subr.mxu0 0.0
    %75 = vmatpush1.msra.mxu0 0.0
    %76 = vmatprep.subr.mxu0 0.0
    %77 = vmatpush1.msra.mxu0 0.0
    %78 = vmatprep.subr.mxu0 0.0
    %79 = vmatpush1.msra.mxu0 0.0
    %80 = vmatprep.subr.mxu0 0.0
    %81 = vmatpush1.msra.mxu0 0.0
    %82 = vmatprep.subr.mxu0 0.0
    %83 = vmatpush1.msra.mxu0 0.0
    %84 = vmatprep.subr.mxu0 0.0
    %85 = vmatpush1.msra.mxu0 0.0
    %86 = vmatprep.subr.mxu0 0.0
    %87 = vmatpush1.msra.mxu0 0.0
    %88 = vmatprep.subr.mxu0 0.0
    %89 = vmatpush1.msra.mxu0 0.0
    %90 = vmatprep.subr.mxu0 0.0
    %91 = vmatpush1.msra.mxu0 0.0
    %92 = vmatprep.subr.mxu0 0.0
    %93 = vmatpush1.msra.mxu0 0.0
    %94 = vmatprep.subr.mxu0 0.0
    %95 = vmatpush1.msra.mxu0 0.0
    %96 = vmatprep.subr.mxu0 0.0
    %97 = vmatpush1.msra.mxu0 0.0
    %98 = vmatprep.subr.mxu0 0.0
    %99 = vmatpush1.msra.mxu0 0.0
    %100 = vmatprep.subr.mxu0 0.0
    %101 = vmatpush1.msra.mxu0 0.0
    %102 = vmatprep.subr.mxu0 0.0
    %103 = vmatpush1.msra.mxu0 0.0
    %104 = vmatprep.subr.mxu0 0.0
    %105 = vmatpush1.msra.mxu0 0.0
    %106 = vmatprep.subr.mxu0 0.0
    %107 = vmatpush1.msra.mxu0 0.0
    %108 = vmatprep.subr.mxu0 0.0
    %109 = vmatpush1.msra.mxu0 0.0
    %110 = vmatprep.subr.mxu0 0.0
    %111 = vmatpush1.msra.mxu0 0.0
    %112 = vmatprep.mubr.f32.mxu0 0.0
    %113 = vmatmul.mubr.f32.gmra.mrb[0].mxu0 %v46
    %v114 = vpop.f32.mrb[0].mxu0
    %v115 = vadd.f32 0.0, %v114
    %v116 = vpop.f32.mrb[0].mxu0
    %117 = vdwg.mxu0
    %v118 = vld [vmem:[%s2] sm:$0x1]
    %v120 = vlaneseq
    %v121 = vshrl.u32 %v120, 7
    %v122 = vsub.s32 0, %v121
    %v123 = vrot.slane %v118, %v122
    %v125 = vmul.f32 %v115, %v123
    %v126 = vmax.f32 %v125, -1.0
    %v127 = vmin.f32 %v126, 1.0
    %v128 = vlaneseq
    %v129 = vand.u32 %v128, 127
    %s130 = smul.u32 0, 128
    %v131 = vstv %s130
    %v132 = vadd.s32 %v129, %v131
    %v133 = vld [vmem:[%s3] sm:$0xff]
    %134 = vset.pattern.permute.xlu0 0
    %135 = vperm.xlu0 %134, %v133
    %v136 = vpop.permute.xlu0 %135
    %vm137 = vcmp.eq.s32.totalorder %v132, %v136
    %v138 = vsub.f32 %v127, 0.2
    %v139 = vsel %vm137, %v138, %v127
    %v140 = vmul.f32 %v139, 30.0
    %141 = vst [vmem:[#allocation5] sm:$0xff] %v140
    // Predicated region
    $region22: #{tpu_custom_call.1} parent=1 // pred_check
      _
    $region23: #{tpu_custom_call.1} parent=1 // pred_check_branch
      %143 = sbr.rel (0) target = $region25
    $region24: #{tpu_custom_call.1} parent=1 // pred_region
      %s145 = ssub.s32 128, 128
      %146 = vsyncadd [#allocation4], %s145
      %s148 = sshll.u32 [#allocation5], 4
      %s149 = int_to_ptr.vmem [resolvable:$true] %s148
      %151 = dma.vmem_to_hbm [thread:$0]  %s149, 128, %s4, [#allocation4]
    $region25: #{tpu_custom_call.1} parent=1 // pred_fallthru
      _
    // Predicated region
    $region26: #{tpu_custom_call.1} parent=1 // pred_check
      _
    $region27: #{tpu_custom_call.1} parent=1 // pred_check_branch
      %153 = sbr.rel (0) target = $region29
    $region28: #{tpu_custom_call.1} parent=1 // pred_region
      %154 = dma.done [#allocation4], 128
    $region29: #{tpu_custom_call.1} parent=1 // pred_fallthru
      _
    %155 = vsyncpa [#allocation3], 1
    %156 = vsyncpa [#allocation4], 1

</llo_original>
